<compile_context>
chip_gen: v5e
topology: v5e:2x2
jax: 0.10.0
libtpu: 0.0.40
codegen_flags: <defaults>
</compile_context>

<pallas_src>
import jax
import jax.numpy as jnp
from jax import lax
from jax.experimental import pallas as pl
from jax.experimental.pallas import tpu as pltpu


def _round_up(x, m):
    return ((x + m - 1) // m) * m


def fasttext_kernel(text_ref, emb_ref, w_ref, b_ref, out_ref, acc_ref):
    # text_ref : VMEM (batch_tile, seq_len)  int32   token ids for this batch tile
    # emb_ref  : VMEM (tk, emb_pad)          bf16    vocab-chunk of the embedding table
    # w_ref    : VMEM (emb_pad, out_pad)     bf16    fc.weight.T (zero-padded)
    # b_ref    : VMEM (1, out_pad)           f32     fc.bias (zero-padded)
    # out_ref  : VMEM (batch_tile, out_pad)  f32
    # acc_ref  : VMEM (batch_tile, emb_pad)  f32     pooled-sum accumulator
    k = pl.program_id(1)
    nk = pl.num_programs(1)
    batch_tile, seq_len = text_ref.shape
    tk = emb_ref.shape[0]

    @pl.when(k == 0)
    def _init():
        acc_ref[...] = jnp.zeros_like(acc_ref)

    # Bag-of-words counts for *this* vocab chunk only, kept in vregs (never
    # stored to VMEM).  counts[b, v] = #occurrences of token (k*tk + v) in row b.
    base = k * tk
    vocab_iota = lax.broadcasted_iota(jnp.int32, (batch_tile, tk), 1) + base

    def add_token(tok_col, c):                      # tok_col: (batch_tile, 1) int32
        return c + (tok_col == vocab_iota).astype(jnp.float32)

    counts0 = jnp.zeros((batch_tile, tk), jnp.float32)
    if seq_len <= 32:
        toks = text_ref[...]
        counts = counts0
        for s in range(seq_len):                    # static -> fully unrolled VPU compares
            counts = add_token(toks[:, s:s + 1], counts)
    else:
        # Long sequences: moderate unroll keeps scheduler visibility without
        # bloating the instruction stream / vreg live ranges.
        counts = lax.fori_loop(
            0, seq_len,
            lambda s, c: add_token(text_ref[:, pl.ds(s, 1)], c),
            counts0, unroll=8)

    # Fused K-chunk of the first matmul: acc += counts_chunk @ emb_chunk (MXU).
    # Counts are integers <= seq_len, exact in bf16; accumulate in f32.
    acc_ref[...] += jnp.dot(counts.astype(jnp.bfloat16), emb_ref[...],
                            preferred_element_type=jnp.float32)

    @pl.when(k == nk - 1)
    def _finalize():
        inv_len = jnp.float32(1.0 / seq_len)        # mean pooling over seq
        pooled = (acc_ref[...] * inv_len).astype(jnp.bfloat16)
        out_ref[...] = (
            jnp.dot(pooled, w_ref[...], preferred_element_type=jnp.float32)
            + b_ref[...]
        ).astype(out_ref.dtype)


def prepare_fasttext_params(emb_table, fc_w, fc_b, *, vocab_chunk=512):
    """One-time (per model) padding / transpose / bf16 cast of the weights.

    emb_table: [vocab, emb_dim]; fc_w: [out_dim, emb_dim] (PyTorch layout);
    fc_b: [out_dim].  Hoisted out of the per-call path so the big HBM copies
    happen once, not per forward call.
    """
    vocab, emb_dim = emb_table.shape
    out_dim = fc_w.shape[0]

    vpad = _round_up(vocab, 128)
    tk = min(vocab_chunk, vpad)            # vocab streamed in (tk, emb_pad) blocks
    vpad = _round_up(vpad, tk)
    epad = _round_up(emb_dim, 128)
    opad = _round_up(out_dim, 128)

    emb_p = jnp.zeros((vpad, epad), jnp.bfloat16)
    emb_p = emb_p.at[:vocab, :emb_dim].set(emb_table.astype(jnp.bfloat16))

    w_p = jnp.zeros((epad, opad), jnp.bfloat16)
    w_p = w_p.at[:emb_dim, :out_dim].set(jnp.transpose(fc_w).astype(jnp.bfloat16))

    b_p = jnp.zeros((1, opad), jnp.float32)
    b_p = b_p.at[0, :out_dim].set(fc_b.astype(jnp.float32))

    return {"emb": emb_p, "w": w_p, "b": b_p, "vocab_chunk": tk,
            "out_dim": out_dim}


def fasttext_forward(text, params):
    """text: [seq_len, batch] int token ids; params from prepare_fasttext_params."""
    emb_p, w_p, b_p = params["emb"], params["w"], params["b"]
    tk = params["vocab_chunk"]
    out_dim = params["out_dim"]
    vpad, epad = emb_p.shape
    opad = w_p.shape[1]

    seq_len, batch = text.shape
    # Right-size the batch tile (sublane-aligned); output lanes stay padded to 128.
    batch_tile = min(128, _round_up(batch, 8))
    bpad = _round_up(batch, batch_tile)

    # Per-call glue: token ids -> [batch, seq] (lane dim = seq).  Zero-padded
    # batch rows (id 0) produce pooled rows that are sliced off below.
    text_t = jnp.zeros((bpad, seq_len), jnp.int32)
    text_t = text_t.at[:batch, :].set(jnp.transpose(text).astype(jnp.int32))

    grid = (bpad // batch_tile, vpad // tk)     # (batch tiles, vocab chunks)

    # VMEM budget estimate (double-buffered streamed operands + output + acc).
    est_bytes = (2 * batch_tile * max(seq_len, 128) * 4    # token ids
                 + 2 * tk * epad * 2                       # emb chunk (bf16)
                 + 2 * epad * opad * 2                     # fc weight (bf16)
                 + 2 * 8 * opad * 4                        # bias
                 + 2 * batch_tile * opad * 4               # output
                 + batch_tile * epad * 4)                  # accumulator scratch
    vmem_limit = int(min(100 * 1024 * 1024, max(4 * est_bytes, 32 * 1024 * 1024)))

    out_p = pl.pallas_call(
        fasttext_kernel,
        out_shape=jax.ShapeDtypeStruct((bpad, opad), jnp.float32),
        grid_spec=pltpu.PrefetchScalarGridSpec(
            num_scalar_prefetch=0,
            grid=grid,
            in_specs=[
                pl.BlockSpec((batch_tile, seq_len), lambda i, k: (i, 0)),  # ids
                pl.BlockSpec((tk, epad), lambda i, k: (k, 0)),             # emb chunk
                pl.BlockSpec((epad, opad), lambda i, k: (0, 0)),           # fc W^T
                pl.BlockSpec((1, opad), lambda i, k: (0, 0)),              # fc bias
            ],
            out_specs=pl.BlockSpec((batch_tile, opad), lambda i, k: (i, 0)),
            scratch_shapes=[pltpu.VMEM((batch_tile, epad), jnp.float32)],
        ),
        compiler_params=pltpu.CompilerParams(
            # Batch tiles shard across TensorCores (v7x); vocab is a reduction.
            dimension_semantics=("parallel", "arbitrary"),
            vmem_limit_bytes=vmem_limit,
        ),
    )(text_t, emb_p, w_p, b_p)

    return out_p[:batch, :out_dim]


if __name__ == "__main__":
    # Small, module-consistent shapes.
    vocab_size, embedding_dim, output_dim, pad_idx = 64, 32, 4, 0
    seq_len, batch = 8, 2

    key = jax.random.PRNGKey(0)
    k_emb, k_w, k_b, k_txt = jax.random.split(key, 4)

    # nn.Embedding init ~ N(0,1); padding_idx row zeroed.
    emb_table = jax.random.normal(k_emb, (vocab_size, embedding_dim), jnp.float32)
    emb_table = emb_table.at[pad_idx].set(0.0)

    # nn.Linear init: uniform(-1/sqrt(in), 1/sqrt(in)).
    bound = 1.0 / jnp.sqrt(jnp.float32(embedding_dim))
    fc_w = jax.random.uniform(k_w, (output_dim, embedding_dim), jnp.float32,
                              -bound, bound)
    fc_b = jax.random.uniform(k_b, (output_dim,), jnp.float32, -bound, bound)

    # text: [seq_len, batch] token ids (include some pad tokens).
    text = jax.random.randint(k_txt, (seq_len, batch), 0, vocab_size, jnp.int32)
    text = text.at[-1, :].set(pad_idx)

    params = prepare_fasttext_params(emb_table, fc_w, fc_b)   # once per model
    out = fasttext_forward(text, params)
    out = jax.block_until_ready(out)

    # Pure-JAX f32 reference (gather + mean + linear).
    embedded = emb_table[text]                                      # [seq, batch, emb]
    pooled = jnp.mean(jnp.transpose(embedded, (1, 0, 2)), axis=1)   # [batch, emb]
    ref = pooled @ fc_w.T + fc_b                                    # [batch, out_dim]

    assert out.shape == (batch, output_dim)
    # Tolerance accounts for intentional bf16 matmul operands (table / weights);
    # mean pooling over seq_len keeps the error well inside this bound.
    assert jnp.allclose(out, ref, atol=3e-2, rtol=3e-2), (out, ref)
    print("KERNEL_OK")
</pallas_src>

<mosaic_0001>
module attributes {stable_mosaic.version = 11 : i64} {
  func.func @fasttext_kernel(%arg0: i32, %arg1: i32, %arg2: memref<8x8xi32, #tpu.memory_space<vmem>>, %arg3: memref<128x128xbf16, #tpu.memory_space<vmem>>, %arg4: memref<128x128xbf16, #tpu.memory_space<vmem>>, %arg5: memref<1x128xf32, #tpu.memory_space<vmem>>, %arg6: memref<8x128xf32, #tpu.memory_space<vmem>>, %arg7: memref<8x128xf32, #tpu.memory_space<vmem>>) attributes {dimension_semantics = [#tpu.dimension_semantics<parallel>, #tpu.dimension_semantics<arbitrary>], iteration_bounds = array<i64: 1, 1>, scalar_prefetch = 0 : i64, scratch_operands = 1 : i64, tpu.core_type = #tpu.core_type<tc>, window_params = [{transform_indices = @transform_0, window_bounds = array<i64: 8, 8>}, {transform_indices = @transform_1, window_bounds = array<i64: 128, 128>}, {pipeline_mode = #tpu.pipeline_mode<synchronous>, transform_indices = @transform_2, window_bounds = array<i64: 128, 128>}, {pipeline_mode = #tpu.pipeline_mode<synchronous>, transform_indices = @transform_3, window_bounds = array<i64: 1, 128>}, {transform_indices = @transform_4, window_bounds = array<i64: 8, 128>}]} {
    %c0_i32 = arith.constant 0 : i32
    %0 = arith.cmpi eq, %arg1, %c0_i32 : i32
    %1 = arith.extui %0 : i1 to i32
    %c0_i32_0 = arith.constant 0 : i32
    %2 = arith.cmpi ne, %1, %c0_i32_0 : i32
    scf.if %2 {
      %cst_11 = arith.constant 0.000000e+00 : f32
      %66 = vector.broadcast %cst_11 : f32 to vector<8x128xf32>
      %c0_12 = arith.constant 0 : index
      %c0_13 = arith.constant 0 : index
      %67 = vector.load %arg7[%c0_12, %c0_13] : memref<8x128xf32, #tpu.memory_space<vmem>>, vector<8x128xf32>
      tpu.vector_store %arg7[%c0_12, %c0_13], %66 {strides = array<i32>} : memref<8x128xf32, #tpu.memory_space<vmem>>, vector<8x128xf32>,
    } else {
    }
    %c128_i32 = arith.constant 128 : i32
    %3 = arith.muli %arg1, %c128_i32 : i32
    %4 = tpu.iota {dimensions = array<i32: 1>} : vector<8x128xi32>
    %5 = vector.broadcast %3 : i32 to vector<8x128xi32>
    %6 = arith.addi %4, %5 : vector<8x128xi32>
    %cst = arith.constant 0.000000e+00 : f32
    %7 = vector.broadcast %cst : f32 to vector<8x128xf32>
    %c0 = arith.constant 0 : index
    %c0_1 = arith.constant 0 : index
    %8 = vector.load %arg2[%c0, %c0_1] : memref<8x8xi32, #tpu.memory_space<vmem>>, vector<8x8xi32>
    %9 = vector.extract_strided_slice %8 {offsets = [0, 0], sizes = [8, 1], strides = [1, 1]} : vector<8x8xi32> to vector<8x1xi32>
    %10 = vector.broadcast %9 : vector<8x1xi32> to vector<8x128xi32>
    %11 = arith.cmpi eq, %10, %6 : vector<8x128xi32>
    %12 = arith.extui %11 : vector<8x128xi1> to vector<8x128xi32>
    %13 = arith.sitofp %12 : vector<8x128xi32> to vector<8x128xf32>
    %14 = arith.addf %7, %13 : vector<8x128xf32>
    %15 = vector.extract_strided_slice %8 {offsets = [0, 1], sizes = [8, 1], strides = [1, 1]} : vector<8x8xi32> to vector<8x1xi32>
    %16 = vector.broadcast %15 : vector<8x1xi32> to vector<8x128xi32>
    %17 = arith.cmpi eq, %16, %6 : vector<8x128xi32>
    %18 = arith.extui %17 : vector<8x128xi1> to vector<8x128xi32>
    %19 = arith.sitofp %18 : vector<8x128xi32> to vector<8x128xf32>
    %20 = arith.addf %14, %19 : vector<8x128xf32>
    %21 = vector.extract_strided_slice %8 {offsets = [0, 2], sizes = [8, 1], strides = [1, 1]} : vector<8x8xi32> to vector<8x1xi32>
    %22 = vector.broadcast %21 : vector<8x1xi32> to vector<8x128xi32>
    %23 = arith.cmpi eq, %22, %6 : vector<8x128xi32>
    %24 = arith.extui %23 : vector<8x128xi1> to vector<8x128xi32>
    %25 = arith.sitofp %24 : vector<8x128xi32> to vector<8x128xf32>
    %26 = arith.addf %20, %25 : vector<8x128xf32>
    %27 = vector.extract_strided_slice %8 {offsets = [0, 3], sizes = [8, 1], strides = [1, 1]} : vector<8x8xi32> to vector<8x1xi32>
    %28 = vector.broadcast %27 : vector<8x1xi32> to vector<8x128xi32>
    %29 = arith.cmpi eq, %28, %6 : vector<8x128xi32>
    %30 = arith.extui %29 : vector<8x128xi1> to vector<8x128xi32>
    %31 = arith.sitofp %30 : vector<8x128xi32> to vector<8x128xf32>
    %32 = arith.addf %26, %31 : vector<8x128xf32>
    %33 = vector.extract_strided_slice %8 {offsets = [0, 4], sizes = [8, 1], strides = [1, 1]} : vector<8x8xi32> to vector<8x1xi32>
    %34 = vector.broadcast %33 : vector<8x1xi32> to vector<8x128xi32>
    %35 = arith.cmpi eq, %34, %6 : vector<8x128xi32>
    %36 = arith.extui %35 : vector<8x128xi1> to vector<8x128xi32>
    %37 = arith.sitofp %36 : vector<8x128xi32> to vector<8x128xf32>
    %38 = arith.addf %32, %37 : vector<8x128xf32>
    %39 = vector.extract_strided_slice %8 {offsets = [0, 5], sizes = [8, 1], strides = [1, 1]} : vector<8x8xi32> to vector<8x1xi32>
    %40 = vector.broadcast %39 : vector<8x1xi32> to vector<8x128xi32>
    %41 = arith.cmpi eq, %40, %6 : vector<8x128xi32>
    %42 = arith.extui %41 : vector<8x128xi1> to vector<8x128xi32>
    %43 = arith.sitofp %42 : vector<8x128xi32> to vector<8x128xf32>
    %44 = arith.addf %38, %43 : vector<8x128xf32>
    %45 = vector.extract_strided_slice %8 {offsets = [0, 6], sizes = [8, 1], strides = [1, 1]} : vector<8x8xi32> to vector<8x1xi32>
    %46 = vector.broadcast %45 : vector<8x1xi32> to vector<8x128xi32>
    %47 = arith.cmpi eq, %46, %6 : vector<8x128xi32>
    %48 = arith.extui %47 : vector<8x128xi1> to vector<8x128xi32>
    %49 = arith.sitofp %48 : vector<8x128xi32> to vector<8x128xf32>
    %50 = arith.addf %44, %49 : vector<8x128xf32>
    %51 = vector.extract_strided_slice %8 {offsets = [0, 7], sizes = [8, 1], strides = [1, 1]} : vector<8x8xi32> to vector<8x1xi32>
    %52 = vector.broadcast %51 : vector<8x1xi32> to vector<8x128xi32>
    %53 = arith.cmpi eq, %52, %6 : vector<8x128xi32>
    %54 = arith.extui %53 : vector<8x128xi1> to vector<8x128xi32>
    %55 = arith.sitofp %54 : vector<8x128xi32> to vector<8x128xf32>
    %56 = arith.addf %50, %55 : vector<8x128xf32>
    %c0_2 = arith.constant 0 : index
    %c0_3 = arith.constant 0 : index
    %57 = vector.load %arg7[%c0_2, %c0_3] : memref<8x128xf32, #tpu.memory_space<vmem>>, vector<8x128xf32>
    %58 = arith.truncf %56 : vector<8x128xf32> to vector<8x128xbf16>
    %c0_4 = arith.constant 0 : index
    %c0_5 = arith.constant 0 : index
    %59 = vector.load %arg3[%c0_4, %c0_5] : memref<128x128xbf16, #tpu.memory_space<vmem>>, vector<128x128xbf16>
    %cst_6 = arith.constant dense<0.000000e+00> : vector<8x128xf32>
    %60 = tpu.matmul %58, %59, %cst_6 {dimension_numbers = #tpu.dot_dimension_numbers<[1], [0], [0], [1], [0, 0, 1, 1], [], []>} : vector<8x128xbf16>, vector<128x128xbf16>, vector<8x128xf32> -> vector<8x128xf32>
    %61 = arith.addf %57, %60 : vector<8x128xf32>
    %c0_7 = arith.constant 0 : index
    %c0_8 = arith.constant 0 : index
    %62 = vector.load %arg7[%c0_7, %c0_8] : memref<8x128xf32, #tpu.memory_space<vmem>>, vector<8x128xf32>
    tpu.vector_store %arg7[%c0_7, %c0_8], %61 {strides = array<i32>} : memref<8x128xf32, #tpu.memory_space<vmem>>, vector<8x128xf32>,
    %c0_i32_9 = arith.constant 0 : i32
    %63 = arith.cmpi eq, %arg1, %c0_i32_9 : i32
    %64 = arith.extui %63 : i1 to i32
    %c0_i32_10 = arith.constant 0 : i32
    %65 = arith.cmpi ne, %64, %c0_i32_10 : i32
    scf.if %65 {
      %c0_11 = arith.constant 0 : index
      %c0_12 = arith.constant 0 : index
      %66 = vector.load %arg7[%c0_11, %c0_12] : memref<8x128xf32, #tpu.memory_space<vmem>>, vector<8x128xf32>
      %cst_13 = arith.constant 1.250000e-01 : f32
      %67 = vector.broadcast %cst_13 : f32 to vector<8x128xf32>
      %68 = arith.mulf %66, %67 : vector<8x128xf32>
      %69 = arith.truncf %68 : vector<8x128xf32> to vector<8x128xbf16>
      %c0_14 = arith.constant 0 : index
      %c0_15 = arith.constant 0 : index
      %70 = vector.load %arg4[%c0_14, %c0_15] : memref<128x128xbf16, #tpu.memory_space<vmem>>, vector<128x128xbf16>
      %cst_16 = arith.constant dense<0.000000e+00> : vector<8x128xf32>
      %71 = tpu.matmul %69, %70, %cst_16 {dimension_numbers = #tpu.dot_dimension_numbers<[1], [0], [0], [1], [0, 0, 1, 1], [], []>} : vector<8x128xbf16>, vector<128x128xbf16>, vector<8x128xf32> -> vector<8x128xf32>
      %c0_17 = arith.constant 0 : index
      %c0_18 = arith.constant 0 : index
      %72 = vector.load %arg5[%c0_17, %c0_18] : memref<1x128xf32, #tpu.memory_space<vmem>>, vector<1x128xf32>
      %73 = vector.broadcast %72 : vector<1x128xf32> to vector<8x128xf32>
      %74 = arith.addf %71, %73 : vector<8x128xf32>
      %c0_19 = arith.constant 0 : index
      %c0_20 = arith.constant 0 : index
      %75 = vector.load %arg6[%c0_19, %c0_20] : memref<8x128xf32, #tpu.memory_space<vmem>>, vector<8x128xf32>
      tpu.vector_store %arg6[%c0_19, %c0_20], %74 {strides = array<i32>} : memref<8x128xf32, #tpu.memory_space<vmem>>, vector<8x128xf32>,
    } else {
    }
    return
  }
  func.func @transform_0(%arg0: i32, %arg1: i32) -> (i32, i32) {
    %c0_i32 = arith.constant 0 : i32
    %c0_i32_0 = arith.constant 0 : i32
    return %arg0, %c0_i32 : i32, i32
  }
  func.func @transform_1(%arg0: i32, %arg1: i32) -> (i32, i32) {
    %c0_i32 = arith.constant 0 : i32
    %c0_i32_0 = arith.constant 0 : i32
    return %arg1, %c0_i32 : i32, i32
  }
  func.func @transform_2(%arg0: i32, %arg1: i32) -> (i32, i32) {
    %c0_i32 = arith.constant 0 : i32
    %c0_i32_0 = arith.constant 0 : i32
    %c0_i32_1 = arith.constant 0 : i32
    return %c0_i32, %c0_i32_0 : i32, i32
  }
  func.func @transform_3(%arg0: i32, %arg1: i32) -> (i32, i32) {
    %c0_i32 = arith.constant 0 : i32
    %c0_i32_0 = arith.constant 0 : i32
    %c0_i32_1 = arith.constant 0 : i32
    return %c0_i32, %c0_i32_0 : i32, i32
  }
  func.func @transform_4(%arg0: i32, %arg1: i32) -> (i32, i32) {
    %c0_i32 = arith.constant 0 : i32
    %c0_i32_0 = arith.constant 0 : i32
    return %arg0, %c0_i32 : i32, i32
  }
}

</mosaic_0001>

<llo_original>
// kernel: tpu_custom_call.1
$region0: #{tpu_custom_call.1}
  #allocation0 [shape = 'u32[]', space=smem, size = 0x4, offset = 0x4, fixed_abs, tag = 'smem constant byte address 0x4 - core index']
  #allocation1 [shape = 'u32[72,128]{1,0:T(1,128)}', space=vmem, size = 0x9000, scoped, tag = 'internal scratch']
  #allocation2 [shape = 'f32[8,128]{1,0:T(8,128)}', space=vmem, size = 0x1000, scoped, tag = 'scratch operand']
  %s0 = inlined_call_operand.hbm [shape: s32[8,8], index: 0, kind: input, shape index: {}]
  %s1 = inlined_call_operand.hbm [shape: bf16[128,128], index: 1, kind: input, shape index: {}]
  %s2 = inlined_call_operand.hbm [shape: bf16[128,128], index: 2, kind: input, shape index: {}]
  %s3 = inlined_call_operand.vmem [shape: f32[1,128], index: 3, kind: input, shape index: {}]
  %s4 = inlined_call_operand.hbm [shape: f32[8,128], index: 4, kind: output, shape index: {}]
  %s5 = sld [smem:[#allocation0]]
  $region46: #{tpu_custom_call.1} parent=0
    _
  %s7 = ssub.s32 1, %s5
  %s8 = scalar_select 0, %s7, %s5
  $region1: #{tpu_custom_call.1} parent=0
    #allocation3 [shape = 'u8[4096]{0}', space=vmem, size = 0x1000, scoped, tag = 'input window, operand 0, single buffered']
    #allocation4 [shape = 's32[1]{0}', space=sflag, size = 0x4, scoped, tag = 'scoped memory for tpu_custom_call.1']
    #allocation5 [shape = 's32[1]{0}', space=sflag, size = 0x4, scoped, tag = 'scoped memory for tpu_custom_call.1']
    #allocation6 [shape = 'u8[32768]{0}', space=vmem, size = 0x8000, scoped, tag = 'input window, operand 1, single buffered']
    #allocation7 [shape = 's32[1]{0}', space=sflag, size = 0x4, scoped, tag = 'scoped memory for tpu_custom_call.1']
    #allocation8 [shape = 'u8[32768]{0}', space=vmem, size = 0x8000, scoped, tag = 'input window, operand 2, single buffered']
    #allocation9 [shape = 'u8[4096]{0}', space=vmem, size = 0x1000, scoped, tag = 'output window, operand 0, single buffered']
    %9 = vsyncpa [#allocation4], 0
    %10 = vsyncpa [#allocation7], 0
    %11 = vsyncpa [#allocation5], 0
    // Predicated region
    $region2: #{tpu_custom_call.1} parent=1 // pred_check
      _
    $region3: #{tpu_custom_call.1} parent=1 // pred_check_branch
      %13 = sbr.rel (0) target = $region5
    $region4: #{tpu_custom_call.1} parent=1 // pred_region
      %15 = vsyncadd [#allocation4], 0
      %s17 = sshll.u32 %s0, 4
      %s18 = int_to_ptr.hbm [resolvable:$true] %s17
      %s19 = sshll.u32 [#allocation3], 4
      %s20 = int_to_ptr.vmem [resolvable:$true] %s19
      %22 = dma.hbm_to_vmem [thread:$0]  %s18, 128, %s20, [#allocation4]
    $region5: #{tpu_custom_call.1} parent=1 // pred_fallthru
      _
    // Predicated region
    $region6: #{tpu_custom_call.1} parent=1 // pred_check
      _
    $region7: #{tpu_custom_call.1} parent=1 // pred_check_branch
      %24 = sbr.rel (0) target = $region9
    $region8: #{tpu_custom_call.1} parent=1 // pred_region
      %26 = vsyncadd [#allocation7], 0
      %s27 = sshll.u32 %s1, 4
      %s28 = int_to_ptr.hbm [resolvable:$true] %s27
      %s29 = sshll.u32 [#allocation6], 4
      %s30 = int_to_ptr.vmem [resolvable:$true] %s29
      %35 = dma.hbm_to_vmem [thread:$0]  %s28, 1024, %s30, [#allocation7], 64, 64, 4
    $region9: #{tpu_custom_call.1} parent=1 // pred_fallthru
      _
    // Predicated region
    $region10: #{tpu_custom_call.1} parent=1 // pred_check
      _
    $region11: #{tpu_custom_call.1} parent=1 // pred_check_branch
      %37 = sbr.rel (0) target = $region13
    $region12: #{tpu_custom_call.1} parent=1 // pred_region
      %39 = vsyncadd [#allocation7], 0
      %s40 = sshll.u32 %s2, 4
      %s41 = int_to_ptr.hbm [resolvable:$true] %s40
      %s42 = sshll.u32 [#allocation8], 4
      %s43 = int_to_ptr.vmem [resolvable:$true] %s42
      %48 = dma.hbm_to_vmem [thread:$0]  %s41, 1024, %s43, [#allocation7], 64, 64, 4
    $region13: #{tpu_custom_call.1} parent=1 // pred_fallthru
      _
    // Predicated region
    $region14: #{tpu_custom_call.1} parent=1 // pred_check
      _
    $region15: #{tpu_custom_call.1} parent=1 // pred_check_branch
      %50 = sbr.rel (0) target = $region17
    $region16: #{tpu_custom_call.1} parent=1 // pred_region
      _
    $region17: #{tpu_custom_call.1} parent=1 // pred_fallthru
      _
    // Predicated region
    $region18: #{tpu_custom_call.1} parent=1 // pred_check
      _
    $region19: #{tpu_custom_call.1} parent=1 // pred_check_branch
      %52 = sbr.rel (0) target = $region21
    $region20: #{tpu_custom_call.1} parent=1 // pred_region
      %54 = dma.done [#allocation4], 128
    $region21: #{tpu_custom_call.1} parent=1 // pred_fallthru
      _
    // Predicated region
    $region22: #{tpu_custom_call.1} parent=1 // pred_check
      _
    $region23: #{tpu_custom_call.1} parent=1 // pred_check_branch
      %56 = sbr.rel (0) target = $region25
    $region24: #{tpu_custom_call.1} parent=1 // pred_region
      %58 = dma.done [#allocation7], 1024
    $region25: #{tpu_custom_call.1} parent=1 // pred_fallthru
      _
    // Predicated region
    $region26: #{tpu_custom_call.1} parent=1 // pred_check
      _
    $region27: #{tpu_custom_call.1} parent=1 // pred_check_branch
      %60 = sbr.rel (0) target = $region29
    $region28: #{tpu_custom_call.1} parent=1 // pred_region
      %62 = dma.done [#allocation7], 1024
    $region29: #{tpu_custom_call.1} parent=1 // pred_fallthru
      _
    %p63 = scmp.eq.s32.totalorder 0, 0
    // Predicated region
    $region30: #{tpu_custom_call.1} parent=1 // pred_check
      %p64 = pneg %p63
    $region31: #{tpu_custom_call.1} parent=1 // pred_check_branch
      %66 = sbr.rel (%p64) target = $region33
    $region32: #{tpu_custom_call.1} parent=1 // pred_region
      %67 = vst [vmem:[#allocation2] sm:$0xff] 0.0
    $region33: #{tpu_custom_call.1} parent=1 // pred_fallthru
      _
    %s68 = smul.u32 0, 128
    %v69 = vlaneseq
    %v70 = vand.u32 %v69, 127
    %v71 = vstv %s68
    %v72 = vadd.s32 %v70, %v71
    %v73 = vld [vmem:[#allocation3] sm:$0xff]
    %74 = vset.pattern.permute.xlu0 0
    %75 = vperm.xlu0 %74, %v73
    %v76 = vpop.permute.xlu0 %75
    %vm77 = vcmp.eq.s32.totalorder %v76, %v72
    %v78 = vsel %vm77, 1, 0
    %v79 = vcvt.s32.f32 %v78
    %v80 = vadd.f32 %v79, 0.0
    %81 = vset.pattern.permute.xlu0 1
    %82 = vperm.xlu0 %81, %v73
    %v83 = vpop.permute.xlu0 %82
    %vm84 = vcmp.eq.s32.totalorder %v83, %v72
    %v85 = vsel %vm84, 1, 0
    %v86 = vcvt.s32.f32 %v85
    %v87 = vadd.f32 %v80, %v86
    %88 = vset.pattern.permute.xlu0 2
    %89 = vperm.xlu0 %88, %v73
    %v90 = vpop.permute.xlu0 %89
    %vm91 = vcmp.eq.s32.totalorder %v90, %v72
    %v92 = vsel %vm91, 1, 0
    %v93 = vcvt.s32.f32 %v92
    %v94 = vadd.f32 %v87, %v93
    %95 = vset.pattern.permute.xlu0 3
    %96 = vperm.xlu0 %95, %v73
    %v97 = vpop.permute.xlu0 %96
    %vm98 = vcmp.eq.s32.totalorder %v97, %v72
    %v99 = vsel %vm98, 1, 0
    %v100 = vcvt.s32.f32 %v99
    %v101 = vadd.f32 %v94, %v100
    %102 = vset.pattern.permute.xlu0 4
    %103 = vperm.xlu0 %102, %v73
    %v104 = vpop.permute.xlu0 %103
    %vm105 = vcmp.eq.s32.totalorder %v104, %v72
    %v106 = vsel %vm105, 1, 0
    %v107 = vcvt.s32.f32 %v106
    %v108 = vadd.f32 %v101, %v107
    %109 = vset.pattern.permute.xlu0 5
    %110 = vperm.xlu0 %109, %v73
    %v111 = vpop.permute.xlu0 %110
    %vm112 = vcmp.eq.s32.totalorder %v111, %v72
    %v113 = vsel %vm112, 1, 0
    %v114 = vcvt.s32.f32 %v113
    %v115 = vadd.f32 %v108, %v114
    %116 = vset.pattern.permute.xlu0 6
    %117 = vperm.xlu0 %116, %v73
    %v118 = vpop.permute.xlu0 %117
    %vm119 = vcmp.eq.s32.totalorder %v118, %v72
    %v120 = vsel %vm119, 1, 0
    %v121 = vcvt.s32.f32 %v120
    %v122 = vadd.f32 %v115, %v121
    %123 = vset.pattern.permute.xlu0 7
    %124 = vperm.xlu0 %123, %v73
    %v125 = vpop.permute.xlu0 %124
    %vm126 = vcmp.eq.s32.totalorder %v125, %v72
    %v127 = vsel %vm126, 1, 0
    %v128 = vcvt.s32.f32 %v127
    %v129 = vadd.f32 %v122, %v128
    %v130 = vld [vmem:[#allocation2] sm:$0xff]
    %v131 = vpack.c.bf16 %v129, %v129
    %v132 = vld [vmem:[#allocation6] sm:$0xf]
    %v133 = vld [vmem:[#allocation6 + $0x4] sm:$0xf]
    %v134 = vld [vmem:[#allocation6 + $0x8] sm:$0xf]
    %v135 = vld [vmem:[#allocation6 + $0xc] sm:$0xf]
    %v136 = vld [vmem:[#allocation6 + $0x10] sm:$0xf]
    %v137 = vld [vmem:[#allocation6 + $0x14] sm:$0xf]
    %v138 = vld [vmem:[#allocation6 + $0x18] sm:$0xf]
    %v139 = vld [vmem:[#allocation6 + $0x1c] sm:$0xf]
    %v140 = vld [vmem:[#allocation6 + $0x20] sm:$0xf]
    %v141 = vld [vmem:[#allocation6 + $0x24] sm:$0xf]
    %v142 = vld [vmem:[#allocation6 + $0x28] sm:$0xf]
    %v143 = vld [vmem:[#allocation6 + $0x2c] sm:$0xf]
    %v144 = vld [vmem:[#allocation6 + $0x30] sm:$0xf]
    %v145 = vld [vmem:[#allocation6 + $0x34] sm:$0xf]
    %v146 = vld [vmem:[#allocation6 + $0x38] sm:$0xf]
    %v147 = vld [vmem:[#allocation6 + $0x3c] sm:$0xf]
    %v164 = vunpack.c.l.b16 %v132
    %v165 = vunpack.c.l.b16 %v133
    %v166 = vunpack.c.l.b16 %v134
    %v167 = vunpack.c.l.b16 %v135
    %v168 = vunpack.c.l.b16 %v136
    %v169 = vunpack.c.l.b16 %v137
    %v170 = vunpack.c.l.b16 %v138
    %v171 = vunpack.c.l.b16 %v139
    %v172 = vunpack.c.l.b16 %v140
    %v173 = vunpack.c.l.b16 %v141
    %v174 = vunpack.c.l.b16 %v142
    %v175 = vunpack.c.l.b16 %v143
    %v176 = vunpack.c.l.b16 %v144
    %v177 = vunpack.c.l.b16 %v145
    %v178 = vunpack.c.l.b16 %v146
    %v179 = vunpack.c.l.b16 %v147
    %v180 = vpack.c.b16 %v165, %v164
    %v181 = vpack.c.b16 %v167, %v166
    %v182 = vpack.c.b16 %v169, %v168
    %v183 = vpack.c.b16 %v171, %v170
    %v184 = vpack.c.b16 %v173, %v172
    %v185 = vpack.c.b16 %v175, %v174
    %v186 = vpack.c.b16 %v177, %v176
    %v187 = vpack.c.b16 %v179, %v178
    %196 = vmatpush.bf16.msra.mxu0 %v187
    %197 = vmatpush.bf16.msra.mxu0 %v186
    %198 = vmatpush.bf16.msra.mxu0 %v185
    %199 = vmatpush.bf16.msra.mxu0 %v184
    %200 = vmatpush.bf16.msra.mxu0 %v183
    %201 = vmatpush.bf16.msra.mxu0 %v182
    %202 = vmatpush.bf16.msra.mxu0 %v181
    %203 = vmatpush.bf16.msra.mxu0 %v180
    %204 = vmatmul.bf16.gmra.mxu0 %v131
    %v205 = vpop.f32.mrf.mxu0
    %v206 = vadd.f32 0.0, %v205
    %v207 = vpop.f32.mrf.mxu0
    %208 = vdwg.mxu0
    %v209 = vadd.f32 %v130, %v206
    %210 = vst [vmem:[#allocation2] sm:$0xff] %v209
    // Predicated region
    $region34: #{tpu_custom_call.1} parent=1 // pred_check
      %p211 = pneg %p63
    $region35: #{tpu_custom_call.1} parent=1 // pred_check_branch
      %213 = sbr.rel (%p211) target = $region37
    $region36: #{tpu_custom_call.1} parent=1 // pred_region
      %v214 = vld [vmem:[#allocation2] sm:$0xff]
      %v215 = vmul.f32 %v214, 0.125
      %v216 = vpack.c.bf16 %v215, %v215
      %v217 = vld [vmem:[#allocation8] sm:$0xf]
      %v218 = vld [vmem:[#allocation8 + $0x4] sm:$0xf]
      %v219 = vld [vmem:[#allocation8 + $0x8] sm:$0xf]
      %v220 = vld [vmem:[#allocation8 + $0xc] sm:$0xf]
      %v221 = vld [vmem:[#allocation8 + $0x10] sm:$0xf]
      %v222 = vld [vmem:[#allocation8 + $0x14] sm:$0xf]
      %v223 = vld [vmem:[#allocation8 + $0x18] sm:$0xf]
      %v224 = vld [vmem:[#allocation8 + $0x1c] sm:$0xf]
      %v225 = vld [vmem:[#allocation8 + $0x20] sm:$0xf]
      %v226 = vld [vmem:[#allocation8 + $0x24] sm:$0xf]
      %v227 = vld [vmem:[#allocation8 + $0x28] sm:$0xf]
      %v228 = vld [vmem:[#allocation8 + $0x2c] sm:$0xf]
      %v229 = vld [vmem:[#allocation8 + $0x30] sm:$0xf]
      %v230 = vld [vmem:[#allocation8 + $0x34] sm:$0xf]
      %v231 = vld [vmem:[#allocation8 + $0x38] sm:$0xf]
      %v232 = vld [vmem:[#allocation8 + $0x3c] sm:$0xf]
      %v233 = vld [vmem:[%s3] sm:$0x1]
      %v235 = vperm.slane %v233, 0
      %v253 = vunpack.c.l.b16 %v217
      %v254 = vunpack.c.l.b16 %v218
      %v255 = vunpack.c.l.b16 %v219
      %v256 = vunpack.c.l.b16 %v220
      %v257 = vunpack.c.l.b16 %v221
      %v258 = vunpack.c.l.b16 %v222
      %v259 = vunpack.c.l.b16 %v223
      %v260 = vunpack.c.l.b16 %v224
      %v261 = vunpack.c.l.b16 %v225
      %v262 = vunpack.c.l.b16 %v226
      %v263 = vunpack.c.l.b16 %v227
      %v264 = vunpack.c.l.b16 %v228
      %v265 = vunpack.c.l.b16 %v229
      %v266 = vunpack.c.l.b16 %v230
      %v267 = vunpack.c.l.b16 %v231
      %v268 = vunpack.c.l.b16 %v232
      %v269 = vpack.c.b16 %v254, %v253
      %v270 = vpack.c.b16 %v256, %v255
      %v271 = vpack.c.b16 %v258, %v257
      %v272 = vpack.c.b16 %v260, %v259
      %v273 = vpack.c.b16 %v262, %v261
      %v274 = vpack.c.b16 %v264, %v263
      %v275 = vpack.c.b16 %v266, %v265
      %v276 = vpack.c.b16 %v268, %v267
      %285 = vmatpush.bf16.msra.mxu0 %v276
      %286 = vmatpush.bf16.msra.mxu0 %v275
      %287 = vmatpush.bf16.msra.mxu0 %v274
      %288 = vmatpush.bf16.msra.mxu0 %v273
      %289 = vmatpush.bf16.msra.mxu0 %v272
      %290 = vmatpush.bf16.msra.mxu0 %v271
      %291 = vmatpush.bf16.msra.mxu0 %v270
      %292 = vmatpush.bf16.msra.mxu0 %v269
      %293 = vmatmul.bf16.gmra.mxu0 %v216
      %v294 = vpop.f32.mrf.mxu0
      %v295 = vadd.f32 %v235, %v294
      %v296 = vpop.f32.mrf.mxu0
      %297 = vdwg.mxu0
      %298 = vst [vmem:[#allocation9] sm:$0xff] %v295
    $region37: #{tpu_custom_call.1} parent=1 // pred_fallthru
      _
    // Predicated region
    $region38: #{tpu_custom_call.1} parent=1 // pred_check
      _
    $region39: #{tpu_custom_call.1} parent=1 // pred_check_branch
      %300 = sbr.rel (0) target = $region41
    $region40: #{tpu_custom_call.1} parent=1 // pred_region
      %302 = vsyncadd [#allocation5], 0
      %s304 = sshll.u32 [#allocation9], 4
      %s305 = int_to_ptr.vmem [resolvable:$true] %s304
      %s306 = sshll.u32 %s4, 4
      %s307 = int_to_ptr.hbm [resolvable:$true] %s306
      %309 = dma.vmem_to_hbm [thread:$0]  %s305, 128, %s307, [#allocation5]
    $region41: #{tpu_custom_call.1} parent=1 // pred_fallthru
      _
    // Predicated region
    $region42: #{tpu_custom_call.1} parent=1 // pred_check
      _
    $region43: #{tpu_custom_call.1} parent=1 // pred_check_branch
      %311 = sbr.rel (0) target = $region45
    $region44: #{tpu_custom_call.1} parent=1 // pred_region
      %313 = dma.done [#allocation5], 128
    $region45: #{tpu_custom_call.1} parent=1 // pred_fallthru
      _
    %314 = vsyncpa [#allocation4], 1
    %315 = vsyncpa [#allocation7], 1
    %316 = vsyncpa [#allocation5], 1

</llo_original>
